<compile_context>
chip_gen: v7x
topology: tpu7x:2x2x1
jax: 0.10.0
libtpu: 0.0.40
codegen_flags: <defaults>
</compile_context>

<pallas_src>
import functools

import jax
import jax.numpy as jnp
from jax.experimental import pallas as pl
from jax.experimental.pallas import tpu as pltpu

LANE = 128
SUBLANE = 8
INT8_SUBLANE = 32          # int8 (mask) native sublane tiling
TARGET_TR = 1024           # rows per tile: (1024, 128) f32 = 512 KiB / stream / buffer


def _round_up(x, m):
    return -(-x // m) * m


def _detect_num_tensorcores():
    """TensorCores visible to a single pallas_call (megacore / dual-TC chips)."""
    try:
        kind = jax.devices()[0].device_kind.lower()
        if ("v4" in kind) or ("v5p" in kind) or ("v7" in kind) or ("tpu7" in kind):
            return 2
    except Exception:
        pass
    return 1


_NUM_TC = _detect_num_tensorcores()


def _fold_rows(x, tr):
    """(tr, LANE) -> (SUBLANE, LANE) partial sum; keeps the accumulator tiny."""
    return jnp.sum(x.reshape(tr // SUBLANE, SUBLANE, LANE), axis=0)


def _loss_kernel(*refs, loss_type, label_is_scalar, has_weight, has_mask,
                 tr, tpc, n, has_tail):
    need_den = has_mask
    need_cnt = has_mask and has_weight

    it = iter(refs)
    pred_ref = next(it)
    label_ref = next(it)
    w_ref = next(it) if has_weight else None
    m_ref = next(it) if has_mask else None
    num_ref = next(it)
    den_ref = next(it) if need_den else None
    cnt_ref = next(it) if need_cnt else None
    num_acc = next(it)
    den_acc = next(it) if need_den else None
    cnt_acc = next(it) if need_cnt else None

    c = pl.program_id(0)        # parallel (core) axis
    i = pl.program_id(1)        # arbitrary (reduction) axis
    ni = pl.num_programs(1)

    @pl.when(i == 0)
    def _init():
        num_acc[...] = jnp.zeros_like(num_acc)
        if need_den:
            den_acc[...] = jnp.zeros_like(den_acc)
        if need_cnt:
            cnt_acc[...] = jnp.zeros_like(cnt_acc)

    p = pred_ref[...]
    t = label_ref[0] if label_is_scalar else label_ref[...]

    if loss_type == "l1":
        loss = jnp.abs(p - t)
    elif loss_type == "mse":
        d = p - t
        loss = d * d
    elif loss_type == "bce":
        # binary_cross_entropy_with_logits, reduction='none' (numerically stable form)
        loss = jnp.maximum(p, 0.0) - p * t + jnp.log1p(jnp.exp(-jnp.abs(p)))
    elif loss_type == "pre":
        loss = p  # pred already holds the elementwise loss (aggregate_loss path)
    else:
        raise ValueError(f"unknown loss_type {loss_type}")

    mask_f = m_ref[...].astype(jnp.float32) if has_mask else None
    if has_weight and has_mask:
        w = w_ref[...] * mask_f
    elif has_weight:
        w = w_ref[...]
    elif has_mask:
        w = mask_f
    else:
        w = None

    num_tile = loss if w is None else loss * w

    def _accumulate(valid):
        # valid is None on interior tiles (everything in-bounds): no masking work.
        if valid is None:
            nt, dt, ct = num_tile, w, mask_f
        else:
            nt = jnp.where(valid, num_tile, 0.0)
            dt = jnp.where(valid, w, 0.0) if need_den else None
            ct = jnp.where(valid, mask_f, 0.0) if need_cnt else None
        num_acc[...] += _fold_rows(nt, tr)
        if need_den:
            den_acc[...] += _fold_rows(dt, tr)
        if need_cnt:
            cnt_acc[...] += _fold_rows(ct, tr)

    if has_tail:
        # NOTE: int32 index math limits inputs to < 2**31 elements (checked on host).
        tile_idx = c * tpc + i
        tile_start = tile_idx * (tr * LANE)
        is_interior = tile_start + tr * LANE <= n

        @pl.when(is_interior)
        def _interior():
            _accumulate(None)

        @pl.when(jnp.logical_not(is_interior))
        def _boundary():
            # Only the boundary (or fully out-of-range, clamped) tile pays for the
            # iota validity mask; jnp.where keeps NaN/Inf from out-of-bounds garbage
            # (relevant for the BCE transcendentals) out of the sums.
            row = jax.lax.broadcasted_iota(jnp.int32, (tr, LANE), 0)
            col = jax.lax.broadcasted_iota(jnp.int32, (tr, LANE), 1)
            gidx = tile_start + row * LANE + col
            _accumulate(gidx < n)
    else:
        _accumulate(None)

    @pl.when(i == ni - 1)
    def _finalize():
        num_ref[0, 0] = jnp.sum(num_acc[...])
        if need_den:
            den_ref[0, 0] = jnp.sum(den_acc[...])
        if need_cnt:
            cnt_ref[0, 0] = jnp.sum(cnt_acc[...])


def _prep_stream(x, padded, rows):
    flat = x.reshape(-1)
    if flat.shape[0] != padded:          # no-op (zero copies) when already aligned
        flat = jnp.pad(flat, (0, padded - flat.shape[0]))
    return flat.reshape(rows, LANE)


def _broadcast_to_pred(x, pred):
    # TODO(synk): this materializes the broadcast in HBM; expressing e.g. a (B,1,H,W)
    # weight broadcast through the BlockSpec index_map would avoid the extra bytes,
    # but needs shape-specific tiling.
    x = jnp.asarray(x)
    if x.shape == pred.shape:
        return x
    return jnp.broadcast_to(x, pred.shape)


def _aggregate_loss_impl(loss_type, pred, label, weight, mask):
    pred = jnp.asarray(pred, jnp.float32)
    n = int(pred.size)
    if n >= 2 ** 31:
        raise NotImplementedError("int32 index math limits inputs to < 2**31 elements")

    label_arr = jnp.asarray(label, jnp.float32)
    label_is_scalar = (label_arr.size == 1)
    has_weight = weight is not None
    has_mask = mask is not None
    need_den = has_mask
    need_cnt = has_mask and has_weight

    # ---- tiling: minimal host padding, partial boundary tile handled in-kernel ----
    sub = INT8_SUBLANE if has_mask else SUBLANE   # int8 mask stream needs 32-row tiles
    padded = _round_up(n, sub * LANE)
    rows = padded // LANE                         # multiple of `sub`
    tr = min(TARGET_TR, rows)                     # block rows (multiple of `sub`)
    tiles = -(-rows // tr)

    ncores = _NUM_TC if tiles >= _NUM_TC else 1
    tpc = -(-tiles // ncores)                     # tiles per core
    has_tail = (ncores * tpc * tr * LANE) != n

    if ncores * tpc > tiles:
        # odd tile count on a 2-TC chip: clamp; the duplicate tile is fully masked.
        last = tiles - 1
        row_map = lambda c, i: (jnp.minimum(c * tpc + i, last), 0)
    else:
        row_map = lambda c, i: (c * tpc + i, 0)

    stream_spec = pl.BlockSpec((tr, LANE), row_map)

    inputs = [_prep_stream(pred, padded, rows)]
    in_specs = [stream_spec]

    if label_is_scalar:
        inputs.append(label_arr.reshape(1))
        in_specs.append(pl.BlockSpec(memory_space=pltpu.SMEM))
    else:
        lab = _broadcast_to_pred(label_arr, pred).astype(jnp.float32)
        inputs.append(_prep_stream(lab, padded, rows))
        in_specs.append(stream_spec)

    if has_weight:
        w_orig = jnp.asarray(weight, jnp.float32)
        inputs.append(_prep_stream(_broadcast_to_pred(w_orig, pred).astype(jnp.float32),
                                   padded, rows))
        in_specs.append(stream_spec)

    if has_mask:
        m8 = _broadcast_to_pred(mask, pred).astype(jnp.int8)   # single int8 conversion
        inputs.append(_prep_stream(m8, padded, rows))
        in_specs.append(stream_spec)

    out_shape = [jax.ShapeDtypeStruct((ncores, 1), jnp.float32)]
    out_specs = [pl.BlockSpec((1, 1), lambda c, i: (c, 0), memory_space=pltpu.SMEM)]
    scratch = [pltpu.VMEM((SUBLANE, LANE), jnp.float32)]
    for flag in (need_den, need_cnt):
        if flag:
            out_shape.append(jax.ShapeDtypeStruct((ncores, 1), jnp.float32))
            out_specs.append(pl.BlockSpec((1, 1), lambda c, i: (c, 0),
                                          memory_space=pltpu.SMEM))
            scratch.append(pltpu.VMEM((SUBLANE, LANE), jnp.float32))

    kernel = functools.partial(
        _loss_kernel, loss_type=loss_type, label_is_scalar=label_is_scalar,
        has_weight=has_weight, has_mask=has_mask, tr=tr, tpc=tpc, n=n,
        has_tail=has_tail)

    outs = pl.pallas_call(
        kernel,
        out_shape=tuple(out_shape),
        grid_spec=pltpu.PrefetchScalarGridSpec(
            num_scalar_prefetch=0,
            grid=(ncores, tpc),
            in_specs=in_specs,
            out_specs=tuple(out_specs),
            scratch_shapes=scratch),
        compiler_params=pltpu.CompilerParams(
            dimension_semantics=("parallel", "arbitrary")),
    )(*inputs)

    num = jnp.sum(outs[0])
    if not has_mask:
        # PyTorch: without a mask the denominator is weight.sum() at its ORIGINAL
        # (un-broadcast) shape, or a plain mean -- both known without a kernel pass.
        den = jnp.sum(w_orig) if has_weight else jnp.float32(n)
        return num / den

    den = jnp.sum(outs[1])
    if has_weight:
        cnt = jnp.sum(outs[2])                   # mask element count (empty-mask check)
        return jnp.where(cnt == 0, jnp.float32(0.0), num / den)
    # mask only: den IS the count of selected elements
    return jnp.where(den == 0, jnp.float32(0.0), num / den)


_aggregate_loss = jax.jit(_aggregate_loss_impl, static_argnums=(0,))


class Graph:
    """JAX/Pallas port of model/base.py::Graph (loss utilities only)."""

    def __init__(self, opt=None):
        # The reference nn.Module holds no parameters.
        self.opt = opt

    def forward(self, opt, var, training=False):
        # TODO(synk): abstract in the reference (raises NotImplementedError); nothing to port.
        raise NotImplementedError

    def compute_loss(self, opt, var, training=False):
        # TODO(synk): abstract in the reference (raises NotImplementedError); nothing to port.
        raise NotImplementedError

    def L1_loss(self, pred, label=0.0, weight=None, mask=None):
        return _aggregate_loss("l1", pred, label, weight, mask)

    def MSE_loss(self, pred, label=0.0, weight=None, mask=None):
        return _aggregate_loss("mse", pred, label, weight, mask)

    def BCE_loss(self, pred, label, weight=None, mask=None):
        return _aggregate_loss("bce", pred, label, weight, mask)

    def aggregate_loss(self, loss, weight=None, mask=None):
        return _aggregate_loss("pre", loss, 0.0, weight, mask)


# ---- pure-JAX reference (exact PyTorch semantics) for verification -----------
def _ref_aggregate(loss, weight=None, mask=None):
    loss = jnp.asarray(loss, jnp.float32)
    if mask is not None:
        m = jnp.broadcast_to(jnp.asarray(mask, jnp.bool_), loss.shape)
        if int(jnp.sum(m)) == 0:
            return jnp.float32(0.0)
        mf = m.astype(jnp.float32)
        if weight is not None:
            w = jnp.broadcast_to(jnp.asarray(weight, jnp.float32), loss.shape) * mf
            return jnp.sum(loss * w) / jnp.sum(w)
        return jnp.sum(loss * mf) / jnp.sum(mf)
    if weight is not None:
        w_orig = jnp.asarray(weight, jnp.float32)
        wb = jnp.broadcast_to(w_orig, loss.shape)
        # PyTorch divides by weight.sum() at its original (un-expanded) shape here.
        return jnp.sum(loss * wb) / jnp.sum(w_orig)
    return jnp.mean(loss)


def _ref_loss(loss_type, pred, label=0.0, weight=None, mask=None):
    pred = jnp.asarray(pred, jnp.float32)
    label_b = jnp.broadcast_to(jnp.asarray(label, jnp.float32), pred.shape)
    if loss_type == "l1":
        loss = jnp.abs(pred - label_b)
    elif loss_type == "mse":
        loss = (pred - label_b) ** 2
    elif loss_type == "bce":
        loss = (jnp.maximum(pred, 0.0) - pred * label_b
                + jnp.log1p(jnp.exp(-jnp.abs(pred))))
    else:
        loss = pred
    return _ref_aggregate(loss, weight=weight, mask=mask)


if __name__ == "__main__":
    key = jax.random.PRNGKey(0)
    k1, k2, k3, k4, k5, k6 = jax.random.split(key, 6)

    B, C, H, W = 2, 4, 16, 16
    pred = jax.random.normal(k1, (B, C, H, W), dtype=jnp.float32)
    label = jax.random.uniform(k2, (B, C, H, W), dtype=jnp.float32)   # in [0,1] for BCE
    weight = jax.random.uniform(k3, (B, 1, H, W), dtype=jnp.float32) + 0.1
    mask = jax.random.bernoulli(k4, 0.5, (B, C, H, W))

    # odd flat size: exercises the minimal-pad + in-kernel tail-masking path
    pred_odd = jax.random.normal(k5, (3, 5, 33, 17), dtype=jnp.float32)

    # larger input: multi-tile pipelining + partial boundary tile (no host padding)
    pred_big = jax.random.normal(k6, (2, 8, 128, 144), dtype=jnp.float32)
    label_big = jax.random.uniform(k2, (2, 8, 128, 144), dtype=jnp.float32)
    mask_big = jax.random.bernoulli(k4, 0.5, (2, 8, 128, 144))

    g = Graph(opt=None)

    cases = [
        ("l1-plain", g.L1_loss(pred), _ref_loss("l1", pred)),
        ("l1-scalar-label", g.L1_loss(pred, 0.25), _ref_loss("l1", pred, 0.25)),
        ("l1-mask", g.L1_loss(pred, label, mask=mask),
         _ref_loss("l1", pred, label, mask=mask)),
        ("mse-weight", g.MSE_loss(pred, label, weight=weight),
         _ref_loss("mse", pred, label, weight=weight)),
        ("mse-mask-weight", g.MSE_loss(pred, label, weight=weight, mask=mask),
         _ref_loss("mse", pred, label, weight=weight, mask=mask)),
        ("bce-plain", g.BCE_loss(pred, label), _ref_loss("bce", pred, label)),
        ("bce-mask", g.BCE_loss(pred, label, mask=mask),
         _ref_loss("bce", pred, label, mask=mask)),
        ("l1-empty-mask", g.L1_loss(pred, label, mask=jnp.zeros_like(mask)),
         _ref_loss("l1", pred, label, mask=jnp.zeros_like(mask))),
        ("l1-odd-shape", g.L1_loss(pred_odd, 0.5), _ref_loss("l1", pred_odd, 0.5)),
        ("mse-big-mask", g.MSE_loss(pred_big, label_big, mask=mask_big),
         _ref_loss("mse", pred_big, label_big, mask=mask_big)),
        ("agg-weight", g.aggregate_loss(jnp.abs(pred), weight=weight),
         _ref_aggregate(jnp.abs(pred), weight=weight)),
    ]

    for name, got, ref in cases:
        got = jax.block_until_ready(got)
        assert jnp.allclose(got, ref, rtol=1e-4, atol=1e-5), (name, float(got), float(ref))

    print("KERNEL_OK")
</pallas_src>

<mosaic_0001>
module attributes {stable_mosaic.version = 11 : i64} {
  func.func @_loss_kernel(%arg0: i32, %arg1: i32, %arg2: memref<16x128xf32, #tpu.memory_space<vmem>>, %arg3: memref<1xf32, #tpu.memory_space<smem>>, %arg4: memref<1x1xf32, #tpu.memory_space<smem>>, %arg5: memref<8x128xf32, #tpu.memory_space<vmem>>) attributes {dimension_semantics = [#tpu.dimension_semantics<parallel>, #tpu.dimension_semantics<arbitrary>], iteration_bounds = array<i64: 1, 1>, scalar_prefetch = 0 : i64, scratch_operands = 1 : i64, tpu.core_type = #tpu.core_type<tc>, window_params = [{transform_indices = @transform_0, window_bounds = array<i64: 16, 128>}, {transform_indices = @transform_1, window_bounds = array<i64: 1>}, {transform_indices = @transform_2, window_bounds = array<i64: 1, 1>}]} {
    %c0_i32 = arith.constant 0 : i32
    %0 = arith.cmpi eq, %arg1, %c0_i32 : i32
    %1 = arith.extui %0 : i1 to i32
    %c0_i32_0 = arith.constant 0 : i32
    %2 = arith.cmpi ne, %1, %c0_i32_0 : i32
    scf.if %2 {
      %cst_9 = arith.constant 0.000000e+00 : f32
      %16 = vector.broadcast %cst_9 : f32 to vector<8x128xf32>
      %c0_10 = arith.constant 0 : index
      %c0_11 = arith.constant 0 : index
      %17 = vector.load %arg5[%c0_10, %c0_11] : memref<8x128xf32, #tpu.memory_space<vmem>>, vector<8x128xf32>
      tpu.vector_store %arg5[%c0_10, %c0_11], %16 {strides = array<i32>} : memref<8x128xf32, #tpu.memory_space<vmem>>, vector<8x128xf32>,
    } else {
    }
    %c0 = arith.constant 0 : index
    %c0_1 = arith.constant 0 : index
    %3 = vector.load %arg2[%c0, %c0_1] : memref<16x128xf32, #tpu.memory_space<vmem>>, vector<16x128xf32>
    %c0_2 = arith.constant 0 : index
    %4 = memref.load %arg3[%c0_2] : memref<1xf32, #tpu.memory_space<smem>>
    %5 = vector.broadcast %4 : f32 to vector<16x128xf32>
    %6 = arith.subf %3, %5 : vector<16x128xf32>
    %7 = math.absf %6 : vector<16x128xf32>
    %c0_3 = arith.constant 0 : index
    %c0_4 = arith.constant 0 : index
    %8 = vector.load %arg5[%c0_3, %c0_4] : memref<8x128xf32, #tpu.memory_space<vmem>>, vector<8x128xf32>
    %9 = vector.shape_cast %7 : vector<16x128xf32> to vector<2x8x128xf32>
    %cst = arith.constant dense<0.000000e+00> : vector<8x128xf32>
    %10 = vector.multi_reduction <add>, %9, %cst [0] : vector<2x8x128xf32> to vector<8x128xf32>
    %11 = arith.addf %8, %10 : vector<8x128xf32>
    %c0_5 = arith.constant 0 : index
    %c0_6 = arith.constant 0 : index
    %12 = vector.load %arg5[%c0_5, %c0_6] : memref<8x128xf32, #tpu.memory_space<vmem>>, vector<8x128xf32>
    tpu.vector_store %arg5[%c0_5, %c0_6], %11 {strides = array<i32>} : memref<8x128xf32, #tpu.memory_space<vmem>>, vector<8x128xf32>,
    %c0_i32_7 = arith.constant 0 : i32
    %13 = arith.cmpi eq, %arg1, %c0_i32_7 : i32
    %14 = arith.extui %13 : i1 to i32
    %c0_i32_8 = arith.constant 0 : i32
    %15 = arith.cmpi ne, %14, %c0_i32_8 : i32
    scf.if %15 {
      %c0_9 = arith.constant 0 : index
      %c0_10 = arith.constant 0 : index
      %16 = vector.load %arg5[%c0_9, %c0_10] : memref<8x128xf32, #tpu.memory_space<vmem>>, vector<8x128xf32>
      %17 = vector.shape_cast %16 : vector<8x128xf32> to vector<1x8x128xf32>
      %cst_11 = arith.constant dense<0.000000e+00> : vector<1xf32>
      %18 = vector.multi_reduction <add>, %17, %cst_11 [1, 2] : vector<1x8x128xf32> to vector<1xf32>
      %19 = vector.shape_cast %18 : vector<1xf32> to vector<1x1x1xf32>
      %20 = vector.extract %19[0, 0, 0] : f32 from vector<1x1x1xf32>
      %c0_12 = arith.constant 0 : index
      %c0_13 = arith.constant 0 : index
      %21 = memref.load %arg4[%c0_12, %c0_13] : memref<1x1xf32, #tpu.memory_space<smem>>
      memref.store %20, %arg4[%c0_12, %c0_13] : memref<1x1xf32, #tpu.memory_space<smem>>
    } else {
    }
    return
  }
  func.func @transform_0(%arg0: i32, %arg1: i32) -> (i32, i32) {
    %c1_i32 = arith.constant 1 : i32
    %0 = arith.muli %arg0, %c1_i32 : i32
    %1 = arith.addi %0, %arg1 : i32
    %c0_i32 = arith.constant 0 : i32
    %c0_i32_0 = arith.constant 0 : i32
    return %1, %c0_i32 : i32, i32
  }
  func.func @transform_1(%arg0: i32, %arg1: i32) -> i32 {
    %c0_i32 = arith.constant 0 : i32
    %c0_i32_0 = arith.constant 0 : i32
    return %c0_i32 : i32
  }
  func.func @transform_2(%arg0: i32, %arg1: i32) -> (i32, i32) {
    %c0_i32 = arith.constant 0 : i32
    %c0_i32_0 = arith.constant 0 : i32
    return %arg0, %c0_i32 : i32, i32
  }
}

</mosaic_0001>

<llo_original>
// kernel: _aggregate_loss_impl.1
$region0: #{_aggregate_loss_impl.1}
  #allocation0 [shape = 'u32[]', space=smem, size = 0x4, offset = 0x4, fixed_abs, tag = 'smem constant byte address 0x4 - core index']
  #allocation1 [shape = 'u32[144,128]{1,0:T(1,128)}', space=vmem, size = 0x12000, scoped, tag = 'internal scratch']
  #allocation2 [shape = 'f32[8,128]{1,0:T(8,128)}', space=vmem, size = 0x1000, scoped, tag = 'scratch operand']
  #allocation3 [shape = 'f32[1]{0:T(128)S(6)}', space=smem, size = 0x200, scoped, tag = 'scoped memory for _aggregate_loss_impl.1']
  %s0 = inlined_call_operand.vmem [shape: f32[16,128], index: 0, kind: input, shape index: {}]
  %s1 = inlined_call_operand.<no memory space> [shape: f32[1], index: 1, kind: input, shape index: {}]
  %s2 = inlined_call_operand.hbm [shape: f32[1,1], index: 2, kind: output, shape index: {}]
  %s3 = sld [smem:[#allocation0]]
  $region26: #{_aggregate_loss_impl.1} parent=0
    _
  %s5 = ssub.s32 1, %s3
  %s6 = scalar_select 0, %s5, %s3
  %7 = sst [smem:[#allocation3]] %s1
  $region1: #{_aggregate_loss_impl.1} parent=0
    #allocation4 [shape = 'u8[512]{0}', space=smem, size = 0x200, scoped, tag = 'output window, operand 0, single buffered']
    #allocation5 [shape = 's32[1]{0}', space=sflag, size = 0x4, scoped, tag = 'scoped memory for _aggregate_loss_impl.1']
    %8 = vsyncpa [#allocation5], 0
    // Predicated region
    $region2: #{_aggregate_loss_impl.1} parent=1 // pred_check
      _
    $region3: #{_aggregate_loss_impl.1} parent=1 // pred_check_branch
      %10 = sbr.rel (0) target = $region5
    $region4: #{_aggregate_loss_impl.1} parent=1 // pred_region
      %s11 = sadd.s32 0, 0
      %s12 = smul.u32 2, %s11
      %p13 = scmp.lt.s32.totalorder %s12, 1
      %s14 = scalar_select %p13, %s12, 1
      %s15 = smul.addr %s14, 8
      %s16 = scalar_lea.vmem %s0, %s15
      %s17 = sadd.s32 0, 0
      %s18 = smul.u32 2, %s17
    $region5: #{_aggregate_loss_impl.1} parent=1 // pred_fallthru
      _
    // Predicated region
    $region6: #{_aggregate_loss_impl.1} parent=1 // pred_check
      _
    $region7: #{_aggregate_loss_impl.1} parent=1 // pred_check_branch
      %20 = sbr.rel (0) target = $region9
    $region8: #{_aggregate_loss_impl.1} parent=1 // pred_region
      _
    $region9: #{_aggregate_loss_impl.1} parent=1 // pred_fallthru
      _
    %s21 = sadd.s32 0, 0
    %s22 = smul.u32 2, %s21
    %p23 = scmp.lt.s32.totalorder %s22, 1
    %s24 = scalar_select %p23, %s22, 1
    %s25 = smul.addr %s24, 8
    %s26 = scalar_lea.vmem %s0, %s25
    %s27 = sadd.s32 0, 0
    %s28 = smul.u32 2, %s27
    %p29 = scmp.lt.s32.totalorder %s28, 1
    %s30 = scalar_select %p29, %s28, 1
    %s31 = smul.addr %s30, 8
    %s32 = scalar_lea.vmem %s0, %s31
    %s33 = sadd.s32 0, 0
    %s34 = smul.u32 2, %s33
    %p35 = scmp.eq.s32.totalorder 0, 0
    // Predicated region
    $region10: #{_aggregate_loss_impl.1} parent=1 // pred_check
      %p36 = pneg %p35
    $region11: #{_aggregate_loss_impl.1} parent=1 // pred_check_branch
      %38 = sbr.rel (%p36) target = $region13
    $region12: #{_aggregate_loss_impl.1} parent=1 // pred_region
      %39 = vst [vmem:[#allocation2] sm:$0xff] 0.0
    $region13: #{_aggregate_loss_impl.1} parent=1 // pred_fallthru
      _
    %v40 = vld [vmem:[%s32] sm:$0xff]
    %v41 = vld [vmem:[%s32 + $0x8] sm:$0xff]
    %s42 = sld [smem:[#allocation3]]
    %v43 = vstv %s42
    %v44 = vsub.f32 %v40, %v43
    %v45 = vsub.f32 %v41, %v43
    %v46 = vand.u32 2147483647, %v44
    %v47 = vand.u32 2147483647, %v45
    %v48 = vld [vmem:[#allocation2] sm:$0xff]
    %v49 = vadd.f32 %v46, %v47
    %v50 = vadd.f32 %v48, %v49
    %51 = vst [vmem:[#allocation2] sm:$0xff] %v50
    // Predicated region
    $region14: #{_aggregate_loss_impl.1} parent=1 // pred_check
      %p52 = pneg %p35
    $region15: #{_aggregate_loss_impl.1} parent=1 // pred_check_branch
      %54 = sbr.rel (%p52) target = $region17
    $region16: #{_aggregate_loss_impl.1} parent=1 // pred_region
      %v55 = vld [vmem:[#allocation2] sm:$0xff]
      %56 = vadd.xlane.f32.xlu0 %v55
      %v57 = vpop.xlane.xlu0 %56
      %v58 = vrot.slane %v57, 4
      %v59 = vadd.f32 %v57, %v58
      %v60 = vrot.slane %v59, 2
      %v61 = vadd.f32 %v59, %v60
      %v62 = vrot.slane %v61, 1
      %v63 = vadd.f32 %v61, %v62
      %s64 = vtos %v63
      %s65 = scalar_lea.smem [#allocation4], 0
      %66 = sst [smem:[%s65]] %s64
    $region17: #{_aggregate_loss_impl.1} parent=1 // pred_fallthru
      _
    // Predicated region
    $region18: #{_aggregate_loss_impl.1} parent=1 // pred_check
      _
    $region19: #{_aggregate_loss_impl.1} parent=1 // pred_check_branch
      %68 = sbr.rel (0) target = $region21
    $region20: #{_aggregate_loss_impl.1} parent=1 // pred_region
      %s70 = ssub.s32 16, 16
      %71 = vsyncadd [#allocation5], %s70
      %74 = dma.smem_to_hbm [#allocation4], 16, %s2, [#allocation5]
    $region21: #{_aggregate_loss_impl.1} parent=1 // pred_fallthru
      _
    // Predicated region
    $region22: #{_aggregate_loss_impl.1} parent=1 // pred_check
      _
    $region23: #{_aggregate_loss_impl.1} parent=1 // pred_check_branch
      %76 = sbr.rel (0) target = $region25
    $region24: #{_aggregate_loss_impl.1} parent=1 // pred_region
      %77 = dma.done [#allocation5], 16
    $region25: #{_aggregate_loss_impl.1} parent=1 // pred_fallthru
      _
    %78 = sfence
    %79 = vsyncpa [#allocation5], 1

</llo_original>
